<compile_context>
chip_gen: v6e
topology: v6e:2x2x1
jax: 0.10.0
libtpu: 0.0.40
codegen_flags: <defaults>
</compile_context>

<pallas_src>
import functools

import jax
import jax.numpy as jnp
from jax.experimental import pallas as pl
from jax.experimental.pallas import tpu as pltpu


# ---------------------------------------------------------------------------
# Kernel
# ---------------------------------------------------------------------------
def backward_dynamics_kernel(z_ref, u_ref, x_ref,
                             wbz_ref, wbu_ref, wbx_ref, bb_ref,
                             wj_ref, bj_ref, wh_ref, bh_ref,
                             out_ref, *, z_dim):
    f32 = jnp.float32

    # Fused branch nets: the block-diagonal [z|u|x] matmul decomposed into three
    # row-block dots accumulated in f32 (identical to net_z|net_u|net_x + concat).
    br = (jnp.dot(z_ref[...], wbz_ref[...], preferred_element_type=f32)
          + jnp.dot(u_ref[...], wbu_ref[...], preferred_element_type=f32)
          + jnp.dot(x_ref[...], wbx_ref[...], preferred_element_type=f32)
          + bb_ref[...])
    br = jnp.maximum(br, 0.0)                                      # ReLU (f32, VPU)

    # net_joint_hidden : Linear + ReLU  (operands may be bf16, accum f32)
    h = jnp.dot(br.astype(wj_ref.dtype), wj_ref[...],
                preferred_element_type=f32) + bj_ref[...]
    h = jnp.maximum(h, 0.0)

    # Merged heads: lanes [0, z_dim) = mean, [z_dim, 2*z_dim) = logstd, rest 0.
    heads = jnp.dot(h.astype(wh_ref.dtype), wh_ref[...],
                    preferred_element_type=f32) + bh_ref[...]

    # exp() only on the logstd lanes (EUP; selection on VPU is free here).
    col = jax.lax.broadcasted_iota(jnp.int32, heads.shape, 1)
    is_logstd = jnp.logical_and(col >= z_dim, col < 2 * z_dim)
    out_ref[...] = jnp.where(is_logstd, jnp.exp(heads), heads).astype(out_ref.dtype)


# ---------------------------------------------------------------------------
# Parameter packing (done once, outside the hot path)
# ---------------------------------------------------------------------------
def pack_params(params, z_dim, lane=128, compute_dtype=jnp.float32):
    """Pack per-branch / per-head weights into the fused kernel layout."""
    (wz, bz, wu, bu, wx, bx, wjh, bjh, wm, bm, ws, bs) = params
    hz, hu, hx = wz.shape[1], wu.shape[1], wx.shape[1]
    h_branch = hz + hu + hx
    hidden = wjh.shape[1]
    assert 2 * z_dim <= lane or (2 * z_dim) % lane == 0 or True  # handled by padding

    # Row-blocks of the block-diagonal branch weight (each branch mapped to its
    # own column range; zero elsewhere so the summed dots reproduce the concat).
    wbz = jnp.zeros((wz.shape[0], h_branch), jnp.float32).at[:, :hz].set(wz)
    wbu = jnp.zeros((wu.shape[0], h_branch), jnp.float32).at[:, hz:hz + hu].set(wu)
    wbx = jnp.zeros((wx.shape[0], h_branch), jnp.float32).at[:, hz + hu:].set(wx)
    bb = jnp.concatenate([bz, bu, bx], axis=-1)                    # (1, h_branch)

    # Single merged, lane-padded head: [mean | logstd | 0...] padded to P lanes.
    P = max(lane, pl.cdiv(2 * z_dim, lane) * lane)
    wh = (jnp.zeros((hidden, P), jnp.float32)
          .at[:, :z_dim].set(wm)
          .at[:, z_dim:2 * z_dim].set(ws))
    bh = (jnp.zeros((1, P), jnp.float32)
          .at[:, :z_dim].set(bm)
          .at[:, z_dim:2 * z_dim].set(bs))

    dt = compute_dtype
    # Matmul operands in compute_dtype; biases stay f32 (elementwise path is f32).
    return dict(wbz=wbz.astype(dt), wbu=wbu.astype(dt), wbx=wbx.astype(dt),
                bb=bb.astype(jnp.float32),
                wj=wjh.astype(dt), bj=bjh.astype(jnp.float32),
                wh=wh.astype(dt), bh=bh.astype(jnp.float32))


# ---------------------------------------------------------------------------
# Wrapper
# ---------------------------------------------------------------------------
def _choose_tm(batch, tm_max):
    if batch <= tm_max:
        return batch                     # single full-batch block (always legal)
    return max(8, (tm_max // 8) * 8)     # multiple of 8 sublanes otherwise


@functools.partial(jax.jit, static_argnames=("z_dim", "tm_max"))
def backward_dynamics_forward(z_t, u_t, x_t, packed, *, z_dim, tm_max=1024):
    """Returns (loc, scale_diag) of MultivariateNormalDiag(mean, exp(logstd))."""
    wbz, wbu, wbx, bb = packed["wbz"], packed["wbu"], packed["wbx"], packed["bb"]
    wj, bj, wh, bh = packed["wj"], packed["bj"], packed["wh"], packed["bh"]
    P = wh.shape[1]
    cdt = wj.dtype                                   # matmul operand dtype

    z = z_t.astype(cdt)
    u = u_t.astype(cdt)
    x = x_t.astype(cdt)
    B = z.shape[0]
    dz, du, dx = z.shape[1], u.shape[1], x.shape[1]

    TM = _choose_tm(B, tm_max)
    B_pad = pl.cdiv(B, TM) * TM
    if B_pad != B:
        pad = ((0, B_pad - B), (0, 0))
        z, u, x = jnp.pad(z, pad), jnp.pad(u, pad), jnp.pad(x, pad)
    grid = (B_pad // TM,)

    in_spec = lambda d: pl.BlockSpec((TM, d), lambda i: (i, 0))
    w_spec = lambda a: pl.BlockSpec(a.shape, lambda i: (0, 0))     # VMEM-resident

    d_in = dz + du + dx
    h_branch = bb.shape[1]
    hidden = wj.shape[1]
    w_bytes = sum(int(a.size) * a.dtype.itemsize
                  for a in (wbz, wbu, wbx, bb, wj, bj, wh, bh))
    cost = pl.CostEstimate(
        flops=2 * B_pad * (d_in * h_branch + h_branch * hidden + hidden * P),
        transcendentals=B_pad * P,
        bytes_accessed=B_pad * d_in * cdt.itemsize + w_bytes + B_pad * P * 4,
    )

    out = pl.pallas_call(
        functools.partial(backward_dynamics_kernel, z_dim=z_dim),
        out_shape=jax.ShapeDtypeStruct((B_pad, P), jnp.float32),
        grid=grid,
        in_specs=[in_spec(dz), in_spec(du), in_spec(dx),
                  w_spec(wbz), w_spec(wbu), w_spec(wbx), w_spec(bb),
                  w_spec(wj), w_spec(bj), w_spec(wh), w_spec(bh)],
        out_specs=pl.BlockSpec((TM, P), lambda i: (i, 0)),
        compiler_params=pltpu.CompilerParams(
            dimension_semantics=("parallel",),
            vmem_limit_bytes=32 * 1024 * 1024,
        ),
        cost_estimate=cost,
    )(z, u, x, wbz, wbu, wbx, bb, wj, bj, wh, bh)

    loc = out[:B, :z_dim]
    scale_diag = out[:B, z_dim:2 * z_dim]
    return loc, scale_diag


# ---------------------------------------------------------------------------
# Init + pure-JAX reference (matches the PyTorch module semantics)
# ---------------------------------------------------------------------------
def _linear_init(key, fan_in, fan_out):
    kw, kb = jax.random.split(key)
    s = 1.0 / jnp.sqrt(fan_in)
    w = jax.random.uniform(kw, (fan_in, fan_out), jnp.float32, -s, s)
    b = jax.random.uniform(kb, (1, fan_out), jnp.float32, -s, s)
    return w, b


def init_params(key, z_dim, u_dim, x_dim, hz, hu, hx, hidden):
    ks = jax.random.split(key, 6)
    wz, bz = _linear_init(ks[0], z_dim, hz)
    wu, bu = _linear_init(ks[1], u_dim, hu)
    wx, bx = _linear_init(ks[2], x_dim, hx)
    wjh, bjh = _linear_init(ks[3], hz + hu + hx, hidden)
    wm, bm = _linear_init(ks[4], hidden, z_dim)
    ws, bs = _linear_init(ks[5], hidden, z_dim)
    return (wz, bz, wu, bu, wx, bx, wjh, bjh, wm, bm, ws, bs)


def backward_dynamics_ref(z_t, u_t, x_t, params):
    (wz, bz, wu, bu, wx, bx, wjh, bjh, wm, bm, ws, bs) = params
    zo = jnp.maximum(z_t @ wz + bz, 0.0)
    uo = jnp.maximum(u_t @ wu + bu, 0.0)
    xo = jnp.maximum(x_t @ wx + bx, 0.0)
    h = jnp.maximum(jnp.concatenate([zo, uo, xo], axis=-1) @ wjh + bjh, 0.0)
    return h @ wm + bm, jnp.exp(h @ ws + bs)


# ---------------------------------------------------------------------------
if __name__ == "__main__":
    # Small, module-consistent shapes.
    B, z_dim, u_dim, x_dim = 16, 8, 4, 32
    hz = hu = hx = 32
    hidden = 64

    key = jax.random.PRNGKey(0)
    kz, ku, kx, kp = jax.random.split(key, 4)
    z_t = jax.random.normal(kz, (B, z_dim), dtype=jnp.float32)
    u_t = jax.random.normal(ku, (B, u_dim), dtype=jnp.float32)
    x_t = jax.random.normal(kx, (B, x_dim), dtype=jnp.float32)

    params = init_params(kp, z_dim, u_dim, x_dim, hz, hu, hx, hidden)
    loc_ref, scale_ref = backward_dynamics_ref(z_t, u_t, x_t, params)

    # --- f32 operand path (tight numerical check) --------------------------
    packed_f32 = pack_params(params, z_dim, compute_dtype=jnp.float32)
    loc, scale_diag = jax.block_until_ready(
        backward_dynamics_forward(z_t, u_t, x_t, packed_f32, z_dim=z_dim))
    assert loc.shape == (B, z_dim) and scale_diag.shape == (B, z_dim)
    assert jnp.allclose(loc, loc_ref, atol=2e-4, rtol=2e-4)
    assert jnp.allclose(scale_diag, scale_ref, atol=2e-4, rtol=2e-4)
    assert bool(jnp.all(scale_diag > 0.0))

    # --- bf16 matmul-operand path (f32 accumulation; looser tolerance) -----
    packed_bf16 = pack_params(params, z_dim, compute_dtype=jnp.bfloat16)
    loc_b, scale_b = jax.block_until_ready(
        backward_dynamics_forward(z_t, u_t, x_t, packed_bf16, z_dim=z_dim))
    assert jnp.allclose(loc_b, loc_ref, atol=2e-2, rtol=2e-2)
    assert jnp.allclose(scale_b, scale_ref, atol=2e-2, rtol=2e-2)
    assert bool(jnp.all(scale_b > 0.0))

    print("KERNEL_OK")
</pallas_src>

<mosaic_0001>
module attributes {stable_mosaic.version = 11 : i64} {
  func.func @backward_dynamics_kernel(%arg0: i32, %arg1: memref<16x8xf32, #tpu.memory_space<vmem>>, %arg2: memref<16x4xf32, #tpu.memory_space<vmem>>, %arg3: memref<16x32xf32, #tpu.memory_space<vmem>>, %arg4: memref<8x96xf32, #tpu.memory_space<vmem>>, %arg5: memref<4x96xf32, #tpu.memory_space<vmem>>, %arg6: memref<32x96xf32, #tpu.memory_space<vmem>>, %arg7: memref<1x96xf32, #tpu.memory_space<vmem>>, %arg8: memref<96x64xf32, #tpu.memory_space<vmem>>, %arg9: memref<1x64xf32, #tpu.memory_space<vmem>>, %arg10: memref<64x128xf32, #tpu.memory_space<vmem>>, %arg11: memref<1x128xf32, #tpu.memory_space<vmem>>, %arg12: memref<16x128xf32, #tpu.memory_space<vmem>>) attributes {dimension_semantics = [#tpu.dimension_semantics<parallel>], iteration_bounds = array<i64: 1>, scalar_prefetch = 0 : i64, scratch_operands = 0 : i64, tpu.core_type = #tpu.core_type<tc>, window_params = [{transform_indices = @transform_0, window_bounds = array<i64: 16, 8>}, {transform_indices = @transform_1, window_bounds = array<i64: 16, 4>}, {transform_indices = @transform_2, window_bounds = array<i64: 16, 32>}, {pipeline_mode = #tpu.pipeline_mode<synchronous>, transform_indices = @transform_3, window_bounds = array<i64: 8, 96>}, {pipeline_mode = #tpu.pipeline_mode<synchronous>, transform_indices = @transform_4, window_bounds = array<i64: 4, 96>}, {pipeline_mode = #tpu.pipeline_mode<synchronous>, transform_indices = @transform_5, window_bounds = array<i64: 32, 96>}, {pipeline_mode = #tpu.pipeline_mode<synchronous>, transform_indices = @transform_6, window_bounds = array<i64: 1, 96>}, {pipeline_mode = #tpu.pipeline_mode<synchronous>, transform_indices = @transform_7, window_bounds = array<i64: 96, 64>}, {pipeline_mode = #tpu.pipeline_mode<synchronous>, transform_indices = @transform_8, window_bounds = array<i64: 1, 64>}, {pipeline_mode = #tpu.pipeline_mode<synchronous>, transform_indices = @transform_9, window_bounds = array<i64: 64, 128>}, {pipeline_mode = #tpu.pipeline_mode<synchronous>, transform_indices = @transform_10, window_bounds = array<i64: 1, 128>}, {transform_indices = @transform_11, window_bounds = array<i64: 16, 128>}]} {
    %c0 = arith.constant 0 : index
    %c0_0 = arith.constant 0 : index
    %0 = vector.load %arg1[%c0, %c0_0] : memref<16x8xf32, #tpu.memory_space<vmem>>, vector<16x8xf32>
    %c0_1 = arith.constant 0 : index
    %c0_2 = arith.constant 0 : index
    %1 = vector.load %arg4[%c0_1, %c0_2] : memref<8x96xf32, #tpu.memory_space<vmem>>, vector<8x96xf32>
    %cst = arith.constant dense<0.000000e+00> : vector<16x96xf32>
    %2 = tpu.matmul %0, %1, %cst {dimension_numbers = #tpu.dot_dimension_numbers<[1], [0], [0], [1], [0, 0, 1, 1], [], []>} : vector<16x8xf32>, vector<8x96xf32>, vector<16x96xf32> -> vector<16x96xf32>
    %c0_3 = arith.constant 0 : index
    %c0_4 = arith.constant 0 : index
    %3 = vector.load %arg2[%c0_3, %c0_4] : memref<16x4xf32, #tpu.memory_space<vmem>>, vector<16x4xf32>
    %c0_5 = arith.constant 0 : index
    %c0_6 = arith.constant 0 : index
    %4 = vector.load %arg5[%c0_5, %c0_6] : memref<4x96xf32, #tpu.memory_space<vmem>>, vector<4x96xf32>
    %cst_7 = arith.constant dense<0.000000e+00> : vector<16x96xf32>
    %5 = tpu.matmul %3, %4, %cst_7 {dimension_numbers = #tpu.dot_dimension_numbers<[1], [0], [0], [1], [0, 0, 1, 1], [], []>} : vector<16x4xf32>, vector<4x96xf32>, vector<16x96xf32> -> vector<16x96xf32>
    %6 = arith.addf %2, %5 : vector<16x96xf32>
    %c0_8 = arith.constant 0 : index
    %c0_9 = arith.constant 0 : index
    %7 = vector.load %arg3[%c0_8, %c0_9] : memref<16x32xf32, #tpu.memory_space<vmem>>, vector<16x32xf32>
    %c0_10 = arith.constant 0 : index
    %c0_11 = arith.constant 0 : index
    %8 = vector.load %arg6[%c0_10, %c0_11] : memref<32x96xf32, #tpu.memory_space<vmem>>, vector<32x96xf32>
    %cst_12 = arith.constant dense<0.000000e+00> : vector<16x96xf32>
    %9 = tpu.matmul %7, %8, %cst_12 {dimension_numbers = #tpu.dot_dimension_numbers<[1], [0], [0], [1], [0, 0, 1, 1], [], []>} : vector<16x32xf32>, vector<32x96xf32>, vector<16x96xf32> -> vector<16x96xf32>
    %10 = arith.addf %6, %9 : vector<16x96xf32>
    %c0_13 = arith.constant 0 : index
    %c0_14 = arith.constant 0 : index
    %11 = vector.load %arg7[%c0_13, %c0_14] : memref<1x96xf32, #tpu.memory_space<vmem>>, vector<1x96xf32>
    %12 = vector.broadcast %11 : vector<1x96xf32> to vector<16x96xf32>
    %13 = arith.addf %10, %12 : vector<16x96xf32>
    %cst_15 = arith.constant 0.000000e+00 : f32
    %14 = vector.broadcast %cst_15 : f32 to vector<16x96xf32>
    %15 = arith.maximumf %13, %14 : vector<16x96xf32>
    %c0_16 = arith.constant 0 : index
    %c0_17 = arith.constant 0 : index
    %16 = vector.load %arg8[%c0_16, %c0_17] : memref<96x64xf32, #tpu.memory_space<vmem>>, vector<96x64xf32>
    %cst_18 = arith.constant dense<0.000000e+00> : vector<16x64xf32>
    %17 = tpu.matmul %15, %16, %cst_18 {dimension_numbers = #tpu.dot_dimension_numbers<[1], [0], [0], [1], [0, 0, 1, 1], [], []>} : vector<16x96xf32>, vector<96x64xf32>, vector<16x64xf32> -> vector<16x64xf32>
    %c0_19 = arith.constant 0 : index
    %c0_20 = arith.constant 0 : index
    %18 = vector.load %arg9[%c0_19, %c0_20] : memref<1x64xf32, #tpu.memory_space<vmem>>, vector<1x64xf32>
    %19 = vector.broadcast %18 : vector<1x64xf32> to vector<16x64xf32>
    %20 = arith.addf %17, %19 : vector<16x64xf32>
    %cst_21 = arith.constant 0.000000e+00 : f32
    %21 = vector.broadcast %cst_21 : f32 to vector<16x64xf32>
    %22 = arith.maximumf %20, %21 : vector<16x64xf32>
    %c0_22 = arith.constant 0 : index
    %c0_23 = arith.constant 0 : index
    %23 = vector.load %arg10[%c0_22, %c0_23] : memref<64x128xf32, #tpu.memory_space<vmem>>, vector<64x128xf32>
    %cst_24 = arith.constant dense<0.000000e+00> : vector<16x128xf32>
    %24 = tpu.matmul %22, %23, %cst_24 {dimension_numbers = #tpu.dot_dimension_numbers<[1], [0], [0], [1], [0, 0, 1, 1], [], []>} : vector<16x64xf32>, vector<64x128xf32>, vector<16x128xf32> -> vector<16x128xf32>
    %c0_25 = arith.constant 0 : index
    %c0_26 = arith.constant 0 : index
    %25 = vector.load %arg11[%c0_25, %c0_26] : memref<1x128xf32, #tpu.memory_space<vmem>>, vector<1x128xf32>
    %26 = vector.broadcast %25 : vector<1x128xf32> to vector<16x128xf32>
    %27 = arith.addf %24, %26 : vector<16x128xf32>
    %28 = tpu.iota {dimensions = array<i32: 1>} : vector<16x128xi32>
    %c8_i32 = arith.constant 8 : i32
    %29 = vector.broadcast %c8_i32 : i32 to vector<16x128xi32>
    %30 = arith.cmpi sge, %28, %29 : vector<16x128xi32>
    %c16_i32 = arith.constant 16 : i32
    %31 = vector.broadcast %c16_i32 : i32 to vector<16x128xi32>
    %32 = arith.cmpi slt, %28, %31 : vector<16x128xi32>
    %33 = arith.andi %30, %32 : vector<16x128xi1>
    %34 = math.exp %27 : vector<16x128xf32>
    %35 = arith.select %33, %34, %27 : vector<16x128xi1>, vector<16x128xf32>
    %c0_27 = arith.constant 0 : index
    %c0_28 = arith.constant 0 : index
    %36 = vector.load %arg12[%c0_27, %c0_28] : memref<16x128xf32, #tpu.memory_space<vmem>>, vector<16x128xf32>
    tpu.vector_store %arg12[%c0_27, %c0_28], %35 {strides = array<i32>} : memref<16x128xf32, #tpu.memory_space<vmem>>, vector<16x128xf32>,
    return
  }
  func.func @transform_0(%arg0: i32) -> (i32, i32) {
    %c0_i32 = arith.constant 0 : i32
    %c0_i32_0 = arith.constant 0 : i32
    return %arg0, %c0_i32 : i32, i32
  }
  func.func @transform_1(%arg0: i32) -> (i32, i32) {
    %c0_i32 = arith.constant 0 : i32
    %c0_i32_0 = arith.constant 0 : i32
    return %arg0, %c0_i32 : i32, i32
  }
  func.func @transform_2(%arg0: i32) -> (i32, i32) {
    %c0_i32 = arith.constant 0 : i32
    %c0_i32_0 = arith.constant 0 : i32
    return %arg0, %c0_i32 : i32, i32
  }
  func.func @transform_3(%arg0: i32) -> (i32, i32) {
    %c0_i32 = arith.constant 0 : i32
    %c0_i32_0 = arith.constant 0 : i32
    %c0_i32_1 = arith.constant 0 : i32
    return %c0_i32, %c0_i32_0 : i32, i32
  }
  func.func @transform_4(%arg0: i32) -> (i32, i32) {
    %c0_i32 = arith.constant 0 : i32
    %c0_i32_0 = arith.constant 0 : i32
    %c0_i32_1 = arith.constant 0 : i32
    return %c0_i32, %c0_i32_0 : i32, i32
  }
  func.func @transform_5(%arg0: i32) -> (i32, i32) {
    %c0_i32 = arith.constant 0 : i32
    %c0_i32_0 = arith.constant 0 : i32
    %c0_i32_1 = arith.constant 0 : i32
    return %c0_i32, %c0_i32_0 : i32, i32
  }
  func.func @transform_6(%arg0: i32) -> (i32, i32) {
    %c0_i32 = arith.constant 0 : i32
    %c0_i32_0 = arith.constant 0 : i32
    %c0_i32_1 = arith.constant 0 : i32
    return %c0_i32, %c0_i32_0 : i32, i32
  }
  func.func @transform_7(%arg0: i32) -> (i32, i32) {
    %c0_i32 = arith.constant 0 : i32
    %c0_i32_0 = arith.constant 0 : i32
    %c0_i32_1 = arith.constant 0 : i32
    return %c0_i32, %c0_i32_0 : i32, i32
  }
  func.func @transform_8(%arg0: i32) -> (i32, i32) {
    %c0_i32 = arith.constant 0 : i32
    %c0_i32_0 = arith.constant 0 : i32
    %c0_i32_1 = arith.constant 0 : i32
    return %c0_i32, %c0_i32_0 : i32, i32
  }
  func.func @transform_9(%arg0: i32) -> (i32, i32) {
    %c0_i32 = arith.constant 0 : i32
    %c0_i32_0 = arith.constant 0 : i32
    %c0_i32_1 = arith.constant 0 : i32
    return %c0_i32, %c0_i32_0 : i32, i32
  }
  func.func @transform_10(%arg0: i32) -> (i32, i32) {
    %c0_i32 = arith.constant 0 : i32
    %c0_i32_0 = arith.constant 0 : i32
    %c0_i32_1 = arith.constant 0 : i32
    return %c0_i32, %c0_i32_0 : i32, i32
  }
  func.func @transform_11(%arg0: i32) -> (i32, i32) {
    %c0_i32 = arith.constant 0 : i32
    %c0_i32_0 = arith.constant 0 : i32
    return %arg0, %c0_i32 : i32, i32
  }
}

</mosaic_0001>

<llo_original>
// kernel: backward_dynamics_forward.1
$region0: #{backward_dynamics_forward.1}
  #allocation0 [shape = 'u32[]', space=smem, size = 0x4, offset = 0x4, fixed_abs, tag = 'smem constant byte address 0x4 - core index']
  #allocation1 [shape = 'u32[144,128]{1,0:T(1,128)}', space=vmem, size = 0x12000, scoped, tag = 'internal scratch']
  %s0 = inlined_call_operand.vmem [shape: f32[16,8], index: 0, kind: input, shape index: {}]
  %s1 = inlined_call_operand.vmem [shape: f32[16,4], index: 1, kind: input, shape index: {}]
  %s2 = inlined_call_operand.vmem [shape: f32[16,32], index: 2, kind: input, shape index: {}]
  %s3 = inlined_call_operand.vmem [shape: f32[8,96], index: 3, kind: input, shape index: {}]
  %s4 = inlined_call_operand.vmem [shape: f32[4,96], index: 4, kind: input, shape index: {}]
  %s5 = inlined_call_operand.vmem [shape: f32[32,96], index: 5, kind: input, shape index: {}]
  %s6 = inlined_call_operand.vmem [shape: f32[1,96], index: 6, kind: input, shape index: {}]
  %s7 = inlined_call_operand.vmem [shape: f32[96,64], index: 7, kind: input, shape index: {}]
  %s8 = inlined_call_operand.vmem [shape: f32[1,64], index: 8, kind: input, shape index: {}]
  %s9 = inlined_call_operand.vmem [shape: f32[64,128], index: 9, kind: input, shape index: {}]
  %s10 = inlined_call_operand.vmem [shape: f32[1,128], index: 10, kind: input, shape index: {}]
  %s11 = inlined_call_operand.vmem [shape: f32[16,128], index: 11, kind: output, shape index: {}]
  %s12 = sld [smem:[#allocation0]]
  $region54: #{backward_dynamics_forward.1} parent=0
    _
  %s14 = ssub.s32 1, %s12
  %s15 = scalar_select 0, %s14, %s12
  // Predicated region
  $region2: #{backward_dynamics_forward.1} parent=0 // pred_check
    _
  $region3: #{backward_dynamics_forward.1} parent=0 // pred_check_branch
    %17 = sbr.rel (0) target = $region5
  $region4: #{backward_dynamics_forward.1} parent=0 // pred_region
    _
  $region5: #{backward_dynamics_forward.1} parent=0 // pred_fallthru
    _
  // Predicated region
  $region6: #{backward_dynamics_forward.1} parent=0 // pred_check
    _
  $region7: #{backward_dynamics_forward.1} parent=0 // pred_check_branch
    %19 = sbr.rel (0) target = $region9
  $region8: #{backward_dynamics_forward.1} parent=0 // pred_region
    _
  $region9: #{backward_dynamics_forward.1} parent=0 // pred_fallthru
    _
  // Predicated region
  $region10: #{backward_dynamics_forward.1} parent=0 // pred_check
    _
  $region11: #{backward_dynamics_forward.1} parent=0 // pred_check_branch
    %21 = sbr.rel (0) target = $region13
  $region12: #{backward_dynamics_forward.1} parent=0 // pred_region
    _
  $region13: #{backward_dynamics_forward.1} parent=0 // pred_fallthru
    _
  // Predicated region
  $region14: #{backward_dynamics_forward.1} parent=0 // pred_check
    _
  $region15: #{backward_dynamics_forward.1} parent=0 // pred_check_branch
    %23 = sbr.rel (0) target = $region17
  $region16: #{backward_dynamics_forward.1} parent=0 // pred_region
    _
  $region17: #{backward_dynamics_forward.1} parent=0 // pred_fallthru
    _
  // Predicated region
  $region18: #{backward_dynamics_forward.1} parent=0 // pred_check
    _
  $region19: #{backward_dynamics_forward.1} parent=0 // pred_check_branch
    %25 = sbr.rel (0) target = $region21
  $region20: #{backward_dynamics_forward.1} parent=0 // pred_region
    _
  $region21: #{backward_dynamics_forward.1} parent=0 // pred_fallthru
    _
  // Predicated region
  $region22: #{backward_dynamics_forward.1} parent=0 // pred_check
    _
  $region23: #{backward_dynamics_forward.1} parent=0 // pred_check_branch
    %27 = sbr.rel (0) target = $region25
  $region24: #{backward_dynamics_forward.1} parent=0 // pred_region
    _
  $region25: #{backward_dynamics_forward.1} parent=0 // pred_fallthru
    _
  // Predicated region
  $region26: #{backward_dynamics_forward.1} parent=0 // pred_check
    _
  $region27: #{backward_dynamics_forward.1} parent=0 // pred_check_branch
    %29 = sbr.rel (0) target = $region29
  $region28: #{backward_dynamics_forward.1} parent=0 // pred_region
    _
  $region29: #{backward_dynamics_forward.1} parent=0 // pred_fallthru
    _
  // Predicated region
  $region30: #{backward_dynamics_forward.1} parent=0 // pred_check
    _
  $region31: #{backward_dynamics_forward.1} parent=0 // pred_check_branch
    %31 = sbr.rel (0) target = $region33
  $region32: #{backward_dynamics_forward.1} parent=0 // pred_region
    _
  $region33: #{backward_dynamics_forward.1} parent=0 // pred_fallthru
    _
  // Predicated region
  $region34: #{backward_dynamics_forward.1} parent=0 // pred_check
    _
  $region35: #{backward_dynamics_forward.1} parent=0 // pred_check_branch
    %33 = sbr.rel (0) target = $region37
  $region36: #{backward_dynamics_forward.1} parent=0 // pred_region
    _
  $region37: #{backward_dynamics_forward.1} parent=0 // pred_fallthru
    _
  // Predicated region
  $region38: #{backward_dynamics_forward.1} parent=0 // pred_check
    _
  $region39: #{backward_dynamics_forward.1} parent=0 // pred_check_branch
    %35 = sbr.rel (0) target = $region41
  $region40: #{backward_dynamics_forward.1} parent=0 // pred_region
    _
  $region41: #{backward_dynamics_forward.1} parent=0 // pred_fallthru
    _
  // Predicated region
  $region42: #{backward_dynamics_forward.1} parent=0 // pred_check
    _
  $region43: #{backward_dynamics_forward.1} parent=0 // pred_check_branch
    %37 = sbr.rel (0) target = $region45
  $region44: #{backward_dynamics_forward.1} parent=0 // pred_region
    _
  $region45: #{backward_dynamics_forward.1} parent=0 // pred_fallthru
    _
  %v38 = vld [vmem:[%s0] sm:$0xff]
  %v39 = vld [vmem:[%s0 + $0x8] sm:$0xff]
  %v40 = vld [vmem:[%s3] sm:$0xff]
  %v41 = vld [vmem:[%s1] sm:$0xff]
  %v42 = vld [vmem:[%s1 + $0x8] sm:$0xff]
  %v43 = vld [vmem:[%s4] sm:$0xf]
  %vm44 = vcmask 31744
  %v46 = vsel %vm44, %v41, 0
  %v49 = vsel %vm44, %v42, 0
  %vm51 = vcmask 1043456
  %v53 = vsel %vm51, %v43, 0
  %55 = vmatprep.subr.mxu0 0.0
  %56 = vmatpush1.msra.mxu0 0.0
  %57 = vmatprep.subr.mxu0 0.0
  %58 = vmatpush1.msra.mxu0 0.0
  %59 = vmatprep.subr.mxu0 0.0
  %60 = vmatpush1.msra.mxu0 0.0
  %61 = vmatprep.subr.mxu0 0.0
  %62 = vmatpush1.msra.mxu0 0.0
  %63 = vmatprep.subr.mxu0 0.0
  %64 = vmatpush1.msra.mxu0 0.0
  %65 = vmatprep.subr.mxu0 0.0
  %66 = vmatpush1.msra.mxu0 0.0
  %67 = vmatprep.subr.mxu0 0.0
  %68 = vmatpush1.msra.mxu0 0.0
  %69 = vmatprep.subr.mxu0 0.0
  %70 = vmatpush1.msra.mxu0 0.0
  %71 = vmatprep.subr.mxu0 0.0
  %72 = vmatpush1.msra.mxu0 0.0
  %73 = vmatprep.subr.mxu0 0.0
  %74 = vmatpush1.msra.mxu0 0.0
  %75 = vmatprep.subr.mxu0 0.0
  %76 = vmatpush1.msra.mxu0 0.0
  %77 = vmatprep.subr.mxu0 0.0
  %78 = vmatpush1.msra.mxu0 0.0
  %79 = vmatprep.subr.mxu0 0.0
  %80 = vmatpush1.msra.mxu0 0.0
  %81 = vmatprep.subr.mxu0 0.0
  %82 = vmatpush1.msra.mxu0 0.0
  %83 = vmatprep.subr.mxu0 0.0
  %84 = vmatpush1.msra.mxu0 0.0
  %85 = vmatprep.subr.mxu0 0.0
  %86 = vmatpush1.msra.mxu0 %v53
  %87 = vmatprep.subr.mxu0 0.0
  %88 = vmatpush2.msra.mxu0 0.0
  %89 = vmatprep.subr.mxu0 0.0
  %90 = vmatpush2.msra.mxu0 0.0
  %91 = vmatprep.subr.mxu0 0.0
  %92 = vmatpush2.msra.mxu0 0.0
  %93 = vmatprep.subr.mxu0 0.0
  %94 = vmatpush2.msra.mxu0 0.0
  %95 = vmatprep.subr.mxu0 0.0
  %96 = vmatpush2.msra.mxu0 0.0
  %97 = vmatprep.subr.mxu0 0.0
  %98 = vmatpush2.msra.mxu0 0.0
  %99 = vmatprep.subr.mxu0 0.0
  %100 = vmatpush2.msra.mxu0 0.0
  %101 = vmatprep.subr.mxu0 0.0
  %102 = vmatpush2.msra.mxu0 0.0
  %103 = vmatprep.subr.mxu0 0.0
  %104 = vmatpush2.msra.mxu0 0.0
  %105 = vmatprep.subr.mxu0 0.0
  %106 = vmatpush2.msra.mxu0 0.0
  %107 = vmatprep.subr.mxu0 0.0
  %108 = vmatpush2.msra.mxu0 0.0
  %109 = vmatprep.subr.mxu0 0.0
  %110 = vmatpush2.msra.mxu0 0.0
  %111 = vmatprep.subr.mxu0 0.0
  %112 = vmatpush2.msra.mxu0 0.0
  %113 = vmatprep.subr.mxu0 0.0
  %114 = vmatpush2.msra.mxu0 0.0
  %115 = vmatprep.subr.mxu0 0.0
  %116 = vmatpush2.msra.mxu0 0.0
  %117 = vmatprep.subr.mxu0 0.0
  %118 = vmatpush2.msra.mxu0 0.0
  %119 = vmatprep.mubr.f32.mxu0 0.0
  %120 = vmatmul.mubr.f32.gmra.mxu0 %v46
  %v121 = vpop.f32.mrf.mxu0
  %v122 = vadd.f32 0.0, %v121
  %v123 = vpop.f32.mrf.mxu0
  %124 = vmatprep.mubr.f32.mxu0 0.0
  %125 = vmatmul.mubr.f32.gmra.mxu0 %v49
  %v126 = vpop.f32.mrf.mxu0
  %v127 = vadd.f32 0.0, %v126
  %v128 = vpop.f32.mrf.mxu0
  %129 = vdwg.mxu0
  %vm130 = vcmask 64512
  %v132 = vsel %vm130, %v38, 0
  %v135 = vsel %vm130, %v39, 0
  %137 = vmatprep.subr.mxu0 0.0
  %138 = vmatpush1.msra.mxu0 0.0
  %139 = vmatprep.subr.mxu0 0.0
  %140 = vmatpush1.msra.mxu0 0.0
  %141 = vmatprep.subr.mxu0 0.0
  %142 = vmatpush1.msra.mxu0 0.0
  %143 = vmatprep.subr.mxu0 0.0
  %144 = vmatpush1.msra.mxu0 0.0
  %145 = vmatprep.subr.mxu0 0.0
  %146 = vmatpush1.msra.mxu0 0.0
  %147 = vmatprep.subr.mxu0 0.0
  %148 = vmatpush1.msra.mxu0 0.0
  %149 = vmatprep.subr.mxu0 0.0
  %150 = vmatpush1.msra.mxu0 0.0
  %151 = vmatprep.subr.mxu0 0.0
  %152 = vmatpush1.msra.mxu0 0.0
  %153 = vmatprep.subr.mxu0 0.0
  %154 = vmatpush1.msra.mxu0 0.0
  %155 = vmatprep.subr.mxu0 0.0
  %156 = vmatpush1.msra.mxu0 0.0
  %157 = vmatprep.subr.mxu0 0.0
  %158 = vmatpush1.msra.mxu0 0.0
  %159 = vmatprep.subr.mxu0 0.0
  %160 = vmatpush1.msra.mxu0 0.0
  %161 = vmatprep.subr.mxu0 0.0
  %162 = vmatpush1.msra.mxu0 0.0
  %163 = vmatprep.subr.mxu0 0.0
  %164 = vmatpush1.msra.mxu0 0.0
  %165 = vmatprep.subr.mxu0 0.0
  %166 = vmatpush1.msra.mxu0 0.0
  %167 = vmatprep.subr.mxu0 0.0
  %168 = vmatpush1.msra.mxu0 %v40
  %169 = vmatprep.subr.mxu0 0.0
  %170 = vmatpush2.msra.mxu0 0.0
  %171 = vmatprep.subr.mxu0 0.0
  %172 = vmatpush2.msra.mxu0 0.0
  %173 = vmatprep.subr.mxu0 0.0
  %174 = vmatpush2.msra.mxu0 0.0
  %175 = vmatprep.subr.mxu0 0.0
  %176 = vmatpush2.msra.mxu0 0.0
  %177 = vmatprep.subr.mxu0 0.0
  %178 = vmatpush2.msra.mxu0 0.0
  %179 = vmatprep.subr.mxu0 0.0
  %180 = vmatpush2.msra.mxu0 0.0
  %181 = vmatprep.subr.mxu0 0.0
  %182 = vmatpush2.msra.mxu0 0.0
  %183 = vmatprep.subr.mxu0 0.0
  %184 = vmatpush2.msra.mxu0 0.0
  %185 = vmatprep.subr.mxu0 0.0
  %186 = vmatpush2.msra.mxu0 0.0
  %187 = vmatprep.subr.mxu0 0.0
  %188 = vmatpush2.msra.mxu0 0.0
  %189 = vmatprep.subr.mxu0 0.0
  %190 = vmatpush2.msra.mxu0 0.0
  %191 = vmatprep.subr.mxu0 0.0
  %192 = vmatpush2.msra.mxu0 0.0
  %193 = vmatprep.subr.mxu0 0.0
  %194 = vmatpush2.msra.mxu0 0.0
  %195 = vmatprep.subr.mxu0 0.0
  %196 = vmatpush2.msra.mxu0 0.0
  %197 = vmatprep.subr.mxu0 0.0
  %198 = vmatpush2.msra.mxu0 0.0
  %199 = vmatprep.subr.mxu0 0.0
  %200 = vmatpush2.msra.mxu0 0.0
  %201 = vmatprep.mubr.f32.mxu0 0.0
  %202 = vmatmul.mubr.f32.gmra.mxu0 %v132
  %v203 = vpop.f32.mrf.mxu0
  %v204 = vadd.f32 %v122, %v203
  %v205 = vpop.f32.mrf.mxu0
  %206 = vmatprep.mubr.f32.mxu0 0.0
  %207 = vmatmul.mubr.f32.gmra.mxu0 %v135
  %v208 = vpop.f32.mrf.mxu0
  %v209 = vadd.f32 %v127, %v208
  %v210 = vpop.f32.mrf.mxu0
  %211 = vdwg.mxu0
  %v212 = vld [vmem:[%s2] sm:$0xff]
  %v213 = vld [vmem:[%s2 + $0x8] sm:$0xff]
  %v214 = vld [vmem:[%s5] sm:$0xff]
  %v215 = vld [vmem:[%s5 + $0x8] sm:$0xff]
  %v216 = vld [vmem:[%s5 + $0x10] sm:$0xff]
  %v217 = vld [vmem:[%s5 + $0x18] sm:$0xff]
  %vm218 = vcmask 261120
  %v220 = vsel %vm218, %v212, 0
  %v223 = vsel %vm218, %v213, 0
  %225 = vmatprep.subr.mxu0 0.0
  %226 = vmatpush1.msra.mxu0 0.0
  %227 = vmatprep.subr.mxu0 0.0
  %228 = vmatpush1.msra.mxu0 0.0
  %229 = vmatprep.subr.mxu0 0.0
  %230 = vmatpush1.msra.mxu0 0.0
  %231 = vmatprep.subr.mxu0 0.0
  %232 = vmatpush1.msra.mxu0 0.0
  %233 = vmatprep.subr.mxu0 0.0
  %234 = vmatpush1.msra.mxu0 0.0
  %235 = vmatprep.subr.mxu0 0.0
  %236 = vmatpush1.msra.mxu0 0.0
  %237 = vmatprep.subr.mxu0 0.0
  %238 = vmatpush1.msra.mxu0 0.0
  %239 = vmatprep.subr.mxu0 0.0
  %240 = vmatpush1.msra.mxu0 0.0
  %241 = vmatprep.subr.mxu0 0.0
  %242 = vmatpush1.msra.mxu0 0.0
  %243 = vmatprep.subr.mxu0 0.0
  %244 = vmatpush1.msra.mxu0 0.0
  %245 = vmatprep.subr.mxu0 0.0
  %246 = vmatpush1.msra.mxu0 0.0
  %247 = vmatprep.subr.mxu0 0.0
  %248 = vmatpush1.msra.mxu0 0.0
  %249 = vmatprep.subr.mxu0 0.0
  %250 = vmatpush1.msra.mxu0 %v217
  %251 = vmatprep.subr.mxu0 0.0
  %252 = vmatpush1.msra.mxu0 %v216
  %253 = vmatprep.subr.mxu0 0.0
  %254 = vmatpush1.msra.mxu0 %v215
  %255 = vmatprep.subr.mxu0 0.0
  %256 = vmatpush1.msra.mxu0 %v214
  %257 = vmatprep.subr.mxu0 0.0
  %258 = vmatpush2.msra.mxu0 0.0
  %259 = vmatprep.subr.mxu0 0.0
  %260 = vmatpush2.msra.mxu0 0.0
  %261 = vmatprep.subr.mxu0 0.0
  %262 = vmatpush2.msra.mxu0 0.0
  %263 = vmatprep.subr.mxu0 0.0
  %264 = vmatpush2.msra.mxu0 0.0
  %265 = vmatprep.subr.mxu0 0.0
  %266 = vmatpush2.msra.mxu0 0.0
  %267 = vmatprep.subr.mxu0 0.0
  %268 = vmatpush2.msra.mxu0 0.0
  %269 = vmatprep.subr.mxu0 0.0
  %270 = vmatpush2.msra.mxu0 0.0
  %271 = vmatprep.subr.mxu0 0.0
  %272 = vmatpush2.msra.mxu0 0.0
  %273 = vmatprep.subr.mxu0 0.0
  %274 = vmatpush2.msra.mxu0 0.0
  %275 = vmatprep.subr.mxu0 0.0
  %276 = vmatpush2.msra.mxu0 0.0
  %277 = vmatprep.subr.mxu0 0.0
  %278 = vmatpush2.msra.mxu0 0.0
  %279 = vmatprep.subr.mxu0 0.0
  %280 = vmatpush2.msra.mxu0 0.0
  %281 = vmatprep.subr.mxu0 0.0
  %282 = vmatpush2.msra.mxu0 0.0
  %283 = vmatprep.subr.mxu0 0.0
  %284 = vmatpush2.msra.mxu0 0.0
  %285 = vmatprep.subr.mxu0 0.0
  %286 = vmatpush2.msra.mxu0 0.0
  %287 = vmatprep.subr.mxu0 0.0
  %288 = vmatpush2.msra.mxu0 0.0
  %289 = vmatprep.mubr.f32.mxu0 0.0
  %290 = vmatmul.mubr.f32.gmra.mxu0 %v220
  %v291 = vpop.f32.mrf.mxu0
  %v292 = vadd.f32 0.0, %v291
  %v293 = vpop.f32.mrf.mxu0
  %294 = vmatprep.mubr.f32.mxu0 0.0
  %295 = vmatmul.mubr.f32.gmra.mxu0 %v223
  %v296 = vpop.f32.mrf.mxu0
  %v297 = vadd.f32 0.0, %v296
  %v298 = vpop.f32.mrf.mxu0
  %299 = vdwg.mxu0
  %v300 = vadd.f32 %v204, %v292
  %v301 = vadd.f32 %v209, %v297
  %v302 = vld [vmem:[%s6] sm:$0x1]
  %v304 = vlaneseq
  %v305 = vshrl.u32 %v304, 7
  %v306 = vsub.s32 0, %v305
  %v307 = vrot.slane %v302, %v306
  %v309 = vadd.f32 %v300, %v307
  %v310 = vadd.f32 %v301, %v307
  %v311 = vmax.f32 %v309, 0.0
  %v312 = vmax.f32 %v310, 0.0
  %v313 = vld [vmem:[%s7] sm:$0xff]
  %v314 = vld [vmem:[%s7 + $0x8] sm:$0xff]
  %v315 = vld [vmem:[%s7 + $0x10] sm:$0xff]
  %v316 = vld [vmem:[%s7 + $0x18] sm:$0xff]
  %v317 = vld [vmem:[%s7 + $0x20] sm:$0xff]
  %v318 = vld [vmem:[%s7 + $0x28] sm:$0xff]
  %v319 = vld [vmem:[%s7 + $0x30] sm:$0xff]
  %v320 = vld [vmem:[%s7 + $0x38] sm:$0xff]
  %v321 = vld [vmem:[%s7 + $0x40] sm:$0xff]
  %v322 = vld [vmem:[%s7 + $0x48] sm:$0xff]
  %v323 = vld [vmem:[%s7 + $0x50] sm:$0xff]
  %v324 = vld [vmem:[%s7 + $0x58] sm:$0xff]
  %v325 = vld [vmem:[%s8] sm:$0x1]
  %v327 = vlaneseq
  %v328 = vshrl.u32 %v327, 7
  %v329 = vsub.s32 0, %v328
  %v330 = vrot.slane %v325, %v329
  %vm332 = vcmask 785408
  %v334 = vsel %vm332, %v311, 0
  %v337 = vsel %vm332, %v312, 0
  %339 = vmatprep.subr.mxu0 0.0
  %340 = vmatpush1.msra.mxu0 0.0
  %341 = vmatprep.subr.mxu0 0.0
  %342 = vmatpush1.msra.mxu0 0.0
  %343 = vmatprep.subr.mxu0 0.0
  %344 = vmatpush1.msra.mxu0 0.0
  %345 = vmatprep.subr.mxu0 0.0
  %346 = vmatpush1.msra.mxu0 0.0
  %347 = vmatprep.subr.mxu0 0.0
  %348 = vmatpush1.msra.mxu0 %v324
  %349 = vmatprep.subr.mxu0 0.0
  %350 = vmatpush1.msra.mxu0 %v323
  %351 = vmatprep.subr.mxu0 0.0
  %352 = vmatpush1.msra.mxu0 %v322
  %353 = vmatprep.subr.mxu0 0.0
  %354 = vmatpush1.msra.mxu0 %v321
  %355 = vmatprep.subr.mxu0 0.0
  %356 = vmatpush1.msra.mxu0 %v320
  %357 = vmatprep.subr.mxu0 0.0
  %358 = vmatpush1.msra.mxu0 %v319
  %359 = vmatprep.subr.mxu0 0.0
  %360 = vmatpush1.msra.mxu0 %v318
  %361 = vmatprep.subr.mxu0 0.0
  %362 = vmatpush1.msra.mxu0 %v317
  %363 = vmatprep.subr.mxu0 0.0
  %364 = vmatpush1.msra.mxu0 %v316
  %365 = vmatprep.subr.mxu0 0.0
  %366 = vmatpush1.msra.mxu0 %v315
  %367 = vmatprep.subr.mxu0 0.0
  %368 = vmatpush1.msra.mxu0 %v314
  %369 = vmatprep.subr.mxu0 0.0
  %370 = vmatpush1.msra.mxu0 %v313
  %371 = vmatprep.subr.mxu0 0.0
  %372 = vmatpush2.msra.mxu0 0.0
  %373 = vmatprep.subr.mxu0 0.0
  %374 = vmatpush2.msra.mxu0 0.0
  %375 = vmatprep.subr.mxu0 0.0
  %376 = vmatpush2.msra.mxu0 0.0
  %377 = vmatprep.subr.mxu0 0.0
  %378 = vmatpush2.msra.mxu0 0.0
  %379 = vmatprep.subr.mxu0 0.0
  %380 = vmatpush2.msra.mxu0 0.0
  %381 = vmatprep.subr.mxu0 0.0
  %382 = vmatpush2.msra.mxu0 0.0
  %383 = vmatprep.subr.mxu0 0.0
  %384 = vmatpush2.msra.mxu0 0.0
  %385 = vmatprep.subr.mxu0 0.0
  %386 = vmatpush2.msra.mxu0 0.0
  %387 = vmatprep.subr.mxu0 0.0
  %388 = vmatpush2.msra.mxu0 0.0
  %389 = vmatprep.subr.mxu0 0.0
  %390 = vmatpush2.msra.mxu0 0.0
  %391 = vmatprep.subr.mxu0 0.0
  %392 = vmatpush2.msra.mxu0 0.0
  %393 = vmatprep.subr.mxu0 0.0
  %394 = vmatpush2.msra.mxu0 0.0
  %395 = vmatprep.subr.mxu0 0.0
  %396 = vmatpush2.msra.mxu0 0.0
  %397 = vmatprep.subr.mxu0 0.0
  %398 = vmatpush2.msra.mxu0 0.0
  %399 = vmatprep.subr.mxu0 0.0
  %400 = vmatpush2.msra.mxu0 0.0
  %401 = vmatprep.subr.mxu0 0.0
  %402 = vmatpush2.msra.mxu0 0.0
  %403 = vmatprep.mubr.f32.mxu0 0.0
  %404 = vmatmul.mubr.f32.gmra.mxu0 %v334
  %v405 = vpop.f32.mrf.mxu0
  %v406 = vadd.f32 %v330, %v405
  %v407 = vpop.f32.mrf.mxu0
  %408 = vmatprep.mubr.f32.mxu0 0.0
  %409 = vmatmul.mubr.f32.gmra.mxu0 %v337
  %v410 = vpop.f32.mrf.mxu0
  %v411 = vadd.f32 %v330, %v410
  %v412 = vpop.f32.mrf.mxu0
  %413 = vdwg.mxu0
  %v414 = vmax.f32 %v406, 0.0
  %v415 = vmax.f32 %v411, 0.0
  %v416 = vld [vmem:[%s9] sm:$0xff]
  %v417 = vld [vmem:[%s9 + $0x8] sm:$0xff]
  %v418 = vld [vmem:[%s9 + $0x10] sm:$0xff]
  %v419 = vld [vmem:[%s9 + $0x18] sm:$0xff]
  %v420 = vld [vmem:[%s9 + $0x20] sm:$0xff]
  %v421 = vld [vmem:[%s9 + $0x28] sm:$0xff]
  %v422 = vld [vmem:[%s9 + $0x30] sm:$0xff]
  %v423 = vld [vmem:[%s9 + $0x38] sm:$0xff]
  %v424 = vld [vmem:[%s10] sm:$0x1]
  %v426 = vlaneseq
  %v427 = vshrl.u32 %v426, 7
  %v428 = vsub.s32 0, %v427
  %v429 = vrot.slane %v424, %v428
  %vm431 = vcmask 523264
  %v433 = vsel %vm431, %v414, 0
  %v436 = vsel %vm431, %v415, 0
  %438 = vmatprep.subr.mxu0 0.0
  %439 = vmatpush1.msra.mxu0 0.0
  %440 = vmatprep.subr.mxu0 0.0
  %441 = vmatpush1.msra.mxu0 0.0
  %442 = vmatprep.subr.mxu0 0.0
  %443 = vmatpush1.msra.mxu0 0.0
  %444 = vmatprep.subr.mxu0 0.0
  %445 = vmatpush1.msra.mxu0 0.0
  %446 = vmatprep.subr.mxu0 0.0
  %447 = vmatpush1.msra.mxu0 0.0
  %448 = vmatprep.subr.mxu0 0.0
  %449 = vmatpush1.msra.mxu0 0.0
  %450 = vmatprep.subr.mxu0 0.0
  %451 = vmatpush1.msra.mxu0 0.0
  %452 = vmatprep.subr.mxu0 0.0
  %453 = vmatpush1.msra.mxu0 0.0
  %454 = vmatprep.subr.mxu0 0.0
  %455 = vmatpush1.msra.mxu0 %v423
  %456 = vmatprep.subr.mxu0 0.0
  %457 = vmatpush1.msra.mxu0 %v422
  %458 = vmatprep.subr.mxu0 0.0
  %459 = vmatpush1.msra.mxu0 %v421
  %460 = vmatprep.subr.mxu0 0.0
  %461 = vmatpush1.msra.mxu0 %v420
  %462 = vmatprep.subr.mxu0 0.0
  %463 = vmatpush1.msra.mxu0 %v419
  %464 = vmatprep.subr.mxu0 0.0
  %465 = vmatpush1.msra.mxu0 %v418
  %466 = vmatprep.subr.mxu0 0.0
  %467 = vmatpush1.msra.mxu0 %v417
  %468 = vmatprep.subr.mxu0 0.0
  %469 = vmatpush1.msra.mxu0 %v416
  %470 = vmatprep.subr.mxu0 0.0
  %471 = vmatpush2.msra.mxu0 0.0
  %472 = vmatprep.subr.mxu0 0.0
  %473 = vmatpush2.msra.mxu0 0.0
  %474 = vmatprep.subr.mxu0 0.0
  %475 = vmatpush2.msra.mxu0 0.0
  %476 = vmatprep.subr.mxu0 0.0
  %477 = vmatpush2.msra.mxu0 0.0
  %478 = vmatprep.subr.mxu0 0.0
  %479 = vmatpush2.msra.mxu0 0.0
  %480 = vmatprep.subr.mxu0 0.0
  %481 = vmatpush2.msra.mxu0 0.0
  %482 = vmatprep.subr.mxu0 0.0
  %483 = vmatpush2.msra.mxu0 0.0
  %484 = vmatprep.subr.mxu0 0.0
  %485 = vmatpush2.msra.mxu0 0.0
  %486 = vmatprep.subr.mxu0 0.0
  %487 = vmatpush2.msra.mxu0 0.0
  %488 = vmatprep.subr.mxu0 0.0
  %489 = vmatpush2.msra.mxu0 0.0
  %490 = vmatprep.subr.mxu0 0.0
  %491 = vmatpush2.msra.mxu0 0.0
  %492 = vmatprep.subr.mxu0 0.0
  %493 = vmatpush2.msra.mxu0 0.0
  %494 = vmatprep.subr.mxu0 0.0
  %495 = vmatpush2.msra.mxu0 0.0
  %496 = vmatprep.subr.mxu0 0.0
  %497 = vmatpush2.msra.mxu0 0.0
  %498 = vmatprep.subr.mxu0 0.0
  %499 = vmatpush2.msra.mxu0 0.0
  %500 = vmatprep.subr.mxu0 0.0
  %501 = vmatpush2.msra.mxu0 0.0
  %502 = vmatprep.mubr.f32.mxu0 0.0
  %503 = vmatmul.mubr.f32.gmra.mxu0 %v433
  %v504 = vpop.f32.mrf.mxu0
  %v505 = vadd.f32 %v429, %v504
  %v506 = vpop.f32.mrf.mxu0
  %507 = vmatprep.mubr.f32.mxu0 0.0
  %508 = vmatmul.mubr.f32.gmra.mxu0 %v436
  %v509 = vpop.f32.mrf.mxu0
  %v510 = vadd.f32 %v429, %v509
  %v511 = vpop.f32.mrf.mxu0
  %512 = vdwg.mxu0
  %v513 = vlaneseq
  %v514 = vand.u32 %v513, 127
  %vm515 = vcmp.ge.s32.totalorder %v514, 8
  %vm516 = vcmp.lt.s32.totalorder %v514, 16
  %vm517 = vmand %vm515, %vm516
  %v518 = vmul.f32 %v505, 1.442695
  %v519 = vpow.pop %v518
  %v520 = vmul.f32 %v510, 1.442695
  %v521 = vpow.pop %v520
  %v522 = vsel %vm517, %v519, %v505
  %v523 = vsel %vm517, %v521, %v510
  %524 = vst [vmem:[%s11] sm:$0xff] %v522
  %525 = vst [vmem:[%s11 + $0x8] sm:$0xff] %v523
  // Predicated region
  $region46: #{backward_dynamics_forward.1} parent=0 // pred_check
    _
  $region47: #{backward_dynamics_forward.1} parent=0 // pred_check_branch
    %527 = sbr.rel (0) target = $region49
  $region48: #{backward_dynamics_forward.1} parent=0 // pred_region
    _
  $region49: #{backward_dynamics_forward.1} parent=0 // pred_fallthru
    _
  // Predicated region
  $region50: #{backward_dynamics_forward.1} parent=0 // pred_check
    _
  $region51: #{backward_dynamics_forward.1} parent=0 // pred_check_branch
    %529 = sbr.rel (0) target = $region53
  $region52: #{backward_dynamics_forward.1} parent=0 // pred_region
    _
  $region53: #{backward_dynamics_forward.1} parent=0 // pred_fallthru
    _

</llo_original>
